<compile_context>
chip_gen: v6e
topology: v6e:2x2x1
jax: 0.10.0
libtpu: 0.0.40
codegen_flags: <defaults>
</compile_context>

<pallas_src>
import jax
import jax.numpy as jnp
from jax import lax
from jax.experimental import pallas as pl
from jax.experimental.pallas import tpu as pltpu


def _round_up(x, m):
    return (x + m - 1) // m * m


def _gemm_bias_relu_kernel(p_ref, w_ref, b_ref, o_ref):
    """One (M-tile, Cout-tile) of the im2col GEMM with bias + ReLU fused.

    p_ref: (TM, K_pad)      bf16 im2col patch rows for this M tile
    w_ref: (K_pad, TN)      bf16 flattened conv weights for this Cout tile
    b_ref: (1, TN)          f32 bias slice
    o_ref: (TM, TN)         f32 output tile (lane-dense, TN multiple of 128)
    """
    acc = jnp.dot(p_ref[...], w_ref[...], preferred_element_type=jnp.float32)
    acc = acc + b_ref[...]                      # broadcast over rows
    o_ref[...] = jnp.maximum(acc, 0.0).astype(o_ref.dtype)


def basic_conv2d(x_nchw, weight_oihw, bias, *, stride=1, padding=1,
                 tile_m=128, compute_dtype=jnp.bfloat16):
    """Conv2d(...) + ReLU matching PyTorch NCHW semantics (generic stride/padding)."""
    N, Cin, Hin, Win = x_nchw.shape
    Cout, Cin_w, KH, KW = weight_oihw.shape
    assert Cin == Cin_w, "channel mismatch"
    if isinstance(stride, int):
        stride = (stride, stride)
    if isinstance(padding, int):
        padding = (padding, padding)
    sh, sw = stride
    ph, pw = padding

    Hout = (Hin + 2 * ph - KH) // sh + 1
    Wout = (Win + 2 * pw - KW) // sw + 1
    K = KH * KW * Cin
    M = N * Hout * Wout

    # ---- layout glue (XLA): NCHW -> NHWC, zero pad, single im2col pass ----
    x = jnp.transpose(x_nchw, (0, 2, 3, 1)).astype(compute_dtype)   # NHWC, bf16 (halves DMA)
    x = jnp.pad(x, ((0, 0), (ph, ph), (pw, pw), (0, 0)))
    taps = []
    for kh in range(KH):
        for kw in range(KW):
            taps.append(x[:, kh:kh + sh * Hout:sh, kw:kw + sw * Wout:sw, :])
    patches = jnp.concatenate(taps, axis=-1).reshape(M, K)          # (M, KH*KW*Cin)

    # ---- pad K to a multiple of 16 (clean bf16 sublane packing on the weight tile) ----
    K_pad = _round_up(K, 16)
    if K_pad != K:
        patches = jnp.pad(patches, ((0, 0), (0, K_pad - K)))

    # ---- lane-dense weights / bias / output: pad Cout up to a multiple of 128 ----
    Cout_pad = _round_up(Cout, 128)
    # weight rows must match patch column order: index = (kh*KW + kw)*Cin + ci
    w = jnp.transpose(weight_oihw, (2, 3, 1, 0)).reshape(K, Cout)
    w = jnp.pad(w, ((0, K_pad - K), (0, Cout_pad - Cout))).astype(compute_dtype)
    b = jnp.pad(bias.astype(jnp.float32), (0, Cout_pad - Cout)).reshape(1, Cout_pad)

    # ---- tile M (batch folded in) so the pipeline has several steps ----
    tile_m = min(tile_m, _round_up(M, 8))        # keep output tile small (no spills)
    M_pad = _round_up(M, tile_m)
    if M_pad != M:
        patches = jnp.pad(patches, ((0, M_pad - M), (0, 0)))
    grid_m = M_pad // tile_m

    # ---- tile Cout: single resident weight tile for moderate widths,
    #      128-wide streamed tiles for very wide layers ----
    tile_n = Cout_pad if Cout_pad <= 512 else 128     # Cout_pad is a multiple of 128
    grid_n = Cout_pad // tile_n

    itemsize = jnp.dtype(compute_dtype).itemsize
    cost = pl.CostEstimate(
        flops=2 * M * K * Cout,
        transcendentals=0,
        bytes_accessed=(M_pad * K_pad * itemsize        # patches (once per Cout tile)
                        * grid_n
                        + K_pad * Cout_pad * itemsize   # weights
                        + Cout_pad * 4                  # bias
                        + M_pad * Cout_pad * 4),        # output
    )

    # grid = (Cout tiles, M tiles): M varies fastest, so the weight/bias block
    # index is unchanged across consecutive steps -> Pallas skips the re-DMA.
    out = pl.pallas_call(
        _gemm_bias_relu_kernel,
        out_shape=jax.ShapeDtypeStruct((M_pad, Cout_pad), jnp.float32),
        grid=(grid_n, grid_m),
        in_specs=[
            pl.BlockSpec((tile_m, K_pad), lambda j, i: (i, 0)),     # patches: tiled over M
            pl.BlockSpec((K_pad, tile_n), lambda j, i: (0, j)),     # weights: per Cout tile
            pl.BlockSpec((1, tile_n), lambda j, i: (0, j)),         # bias: per Cout tile
        ],
        out_specs=pl.BlockSpec((tile_m, tile_n), lambda j, i: (i, j)),
        compiler_params=pltpu.CompilerParams(
            dimension_semantics=("parallel", "parallel"),   # shards tiles across v7x's 2 TCs
            vmem_limit_bytes=32 * 1024 * 1024,              # safe within v7x's 64 MiB VMEM
        ),
        cost_estimate=cost,
    )(patches, w, b)

    # strip padding, restore NCHW
    out = out[:M, :Cout].reshape(N, Hout, Wout, Cout)
    return jnp.transpose(out, (0, 3, 1, 2))


def reference_conv_relu(x_nchw, weight_oihw, bias, *, stride=1, padding=1,
                        compute_dtype=None):
    if isinstance(stride, int):
        stride = (stride, stride)
    if isinstance(padding, int):
        padding = (padding, padding)
    lhs, rhs = x_nchw, weight_oihw
    if compute_dtype is not None:
        lhs = lhs.astype(compute_dtype)
        rhs = rhs.astype(compute_dtype)
    y = lax.conv_general_dilated(
        lhs, rhs,
        window_strides=stride,
        padding=((padding[0], padding[0]), (padding[1], padding[1])),
        dimension_numbers=("NCHW", "OIHW", "NCHW"),
        preferred_element_type=jnp.float32,
    )
    y = y + bias[None, :, None, None].astype(jnp.float32)
    return jnp.maximum(y, 0.0)


if __name__ == "__main__":
    # BasicConv2d(in_channels=4, out_channels=8, kernel_size=3, padding=1)
    N, Cin, H, W = 2, 4, 16, 16
    Cout, KH, KW = 8, 3, 3

    key = jax.random.PRNGKey(0)
    kx, kw_, kb = jax.random.split(key, 3)
    x = jax.random.normal(kx, (N, Cin, H, W), dtype=jnp.float32)
    weight = jax.random.normal(kw_, (Cout, Cin, KH, KW), dtype=jnp.float32) * 0.1
    bias = jax.random.normal(kb, (Cout,), dtype=jnp.float32) * 0.1

    out = jax.block_until_ready(basic_conv2d(x, weight, bias, stride=1, padding=1))
    assert out.shape == (N, Cout, H, W)

    # Kernel uses bf16 operands with f32 accumulation: compare tightly against a
    # bf16-operand reference, and loosely against the full-f32 reference.
    ref_bf16 = reference_conv_relu(x, weight, bias, stride=1, padding=1,
                                   compute_dtype=jnp.bfloat16)
    assert jnp.allclose(out, ref_bf16, atol=1e-3, rtol=1e-3), "mismatch vs bf16 reference"

    ref_f32 = reference_conv_relu(x, weight, bias, stride=1, padding=1)
    assert jnp.allclose(out, ref_f32, atol=5e-2, rtol=5e-2), "mismatch vs f32 reference"

    print("KERNEL_OK")
</pallas_src>

<mosaic_0001>
module attributes {stable_mosaic.version = 11 : i64} {
  func.func @_gemm_bias_relu_kernel(%arg0: i32, %arg1: i32, %arg2: memref<128x48xbf16, #tpu.memory_space<vmem>>, %arg3: memref<48x128xbf16, #tpu.memory_space<vmem>>, %arg4: memref<1x128xf32, #tpu.memory_space<vmem>>, %arg5: memref<128x128xf32, #tpu.memory_space<vmem>>) attributes {dimension_semantics = [#tpu.dimension_semantics<parallel>, #tpu.dimension_semantics<parallel>], iteration_bounds = array<i64: 1, 4>, scalar_prefetch = 0 : i64, scratch_operands = 0 : i64, tpu.core_type = #tpu.core_type<tc>, window_params = [{transform_indices = @transform_0, window_bounds = array<i64: 128, 48>}, {transform_indices = @transform_1, window_bounds = array<i64: 48, 128>}, {transform_indices = @transform_2, window_bounds = array<i64: 1, 128>}, {transform_indices = @transform_3, window_bounds = array<i64: 128, 128>}]} {
    %c0 = arith.constant 0 : index
    %c0_0 = arith.constant 0 : index
    %0 = vector.load %arg2[%c0, %c0_0] : memref<128x48xbf16, #tpu.memory_space<vmem>>, vector<128x48xbf16>
    %c0_1 = arith.constant 0 : index
    %c0_2 = arith.constant 0 : index
    %1 = vector.load %arg3[%c0_1, %c0_2] : memref<48x128xbf16, #tpu.memory_space<vmem>>, vector<48x128xbf16>
    %cst = arith.constant dense<0.000000e+00> : vector<128x128xf32>
    %2 = tpu.matmul %0, %1, %cst {dimension_numbers = #tpu.dot_dimension_numbers<[1], [0], [0], [1], [0, 0, 1, 1], [], []>} : vector<128x48xbf16>, vector<48x128xbf16>, vector<128x128xf32> -> vector<128x128xf32>
    %c0_3 = arith.constant 0 : index
    %c0_4 = arith.constant 0 : index
    %3 = vector.load %arg4[%c0_3, %c0_4] : memref<1x128xf32, #tpu.memory_space<vmem>>, vector<1x128xf32>
    %4 = vector.broadcast %3 : vector<1x128xf32> to vector<128x128xf32>
    %5 = arith.addf %2, %4 : vector<128x128xf32>
    %cst_5 = arith.constant 0.000000e+00 : f32
    %6 = vector.broadcast %cst_5 : f32 to vector<128x128xf32>
    %7 = arith.maximumf %5, %6 : vector<128x128xf32>
    %c0_6 = arith.constant 0 : index
    %c0_7 = arith.constant 0 : index
    %8 = vector.load %arg5[%c0_6, %c0_7] : memref<128x128xf32, #tpu.memory_space<vmem>>, vector<128x128xf32>
    tpu.vector_store %arg5[%c0_6, %c0_7], %7 {strides = array<i32>} : memref<128x128xf32, #tpu.memory_space<vmem>>, vector<128x128xf32>,
    return
  }
  func.func @transform_0(%arg0: i32, %arg1: i32) -> (i32, i32) {
    %c0_i32 = arith.constant 0 : i32
    %c0_i32_0 = arith.constant 0 : i32
    return %arg1, %c0_i32 : i32, i32
  }
  func.func @transform_1(%arg0: i32, %arg1: i32) -> (i32, i32) {
    %c0_i32 = arith.constant 0 : i32
    %c0_i32_0 = arith.constant 0 : i32
    return %c0_i32, %arg0 : i32, i32
  }
  func.func @transform_2(%arg0: i32, %arg1: i32) -> (i32, i32) {
    %c0_i32 = arith.constant 0 : i32
    %c0_i32_0 = arith.constant 0 : i32
    return %c0_i32, %arg0 : i32, i32
  }
  func.func @transform_3(%arg0: i32, %arg1: i32) -> (i32, i32) {
    %c0_i32 = arith.constant 0 : i32
    return %arg1, %arg0 : i32, i32
  }
}

</mosaic_0001>

<llo_original>
// kernel: tpu_custom_call.1
$region0: #{tpu_custom_call.1}
  #allocation0 [shape = 'u32[]', space=smem, size = 0x4, offset = 0x4, fixed_abs, tag = 'smem constant byte address 0x4 - core index']
  #allocation1 [shape = 'u32[144,128]{1,0:T(1,128)}', space=vmem, size = 0x12000, scoped, tag = 'internal scratch']
  %s0 = inlined_call_operand.vmem [shape: bf16[512,48], index: 0, kind: input, shape index: {}]
  %s1 = inlined_call_operand.vmem [shape: bf16[48,128], index: 1, kind: input, shape index: {}]
  %s2 = inlined_call_operand.vmem [shape: f32[1,128], index: 2, kind: input, shape index: {}]
  %s3 = inlined_call_operand.hbm [shape: f32[512,128], index: 3, kind: output, shape index: {}]
  %s4 = sld [smem:[#allocation0]]
  $region45: #{tpu_custom_call.1} parent=0
    _
  %s6 = ssub.s32 1, %s4
  %s7 = scalar_select 0, %s6, %s4
  $region1: #{tpu_custom_call.1} parent=0
    #allocation2 [shape = 'u8[131072]{0}', space=vmem, size = 0x20000, scoped, tag = 'output window, operand 0']
    #allocation3 [shape = 's32[2]{0}', space=sflag, size = 0x8, scoped, tag = 'scoped memory for tpu_custom_call.1']
    %8 = vsyncpa [#allocation3], 0
    %s9 = scalar_lea.sflag [#allocation3], 1
    %10 = vsyncpa %s9, 0
    loop: start=0, step=1, limit=6
    $region2: #{tpu_custom_call.1} parent=1 // loop_pre_header
      _
    $region3: #{tpu_custom_call.1} parent=1 // loop_header
      %s12 = sphi 0, %s16
      %p13 = scmp.ge.s32.totalorder %s12, 6
      %s19 = sphi 0, %s31
      %s20 = sphi 0, %s27
      %s21 = sphi 0, %s19
      %s22 = sphi 0, %s20
      %s23 = sphi 0, %s21
      %s24 = sphi 0, %s22
      %s34 = sphi 0, %s36
      %s37 = sphi 0, %s34
      %s38 = sphi 0, %s37
      %s54 = sphi 0, %s38
      %s60 = sphi 0, %s62
      %s63 = sphi 0, %s60
      %s64 = sphi 0, %s63
      %s80 = sphi 0, %s64
      %s86 = sphi 0, %s88
      %s89 = sphi 0, %s86
      %s90 = sphi 0, %s89
      %s106 = sphi 0, %s90
      %s114 = sphi 0, %s116
      %s117 = sphi 0, %s114
      %s118 = sphi 0, %s117
      %s134 = sphi 0, %s118
    $region4: #{tpu_custom_call.1} parent=1 // loop_header_branch
      %15 = sbr.rel (%p13) target = $region8
    $region5: #{tpu_custom_call.1} parent=1 // loop_body
      %s17 = ssub.s32 %s12, 1
      %s18 = ssub.s32 %s12, 2
      %s25 = sadd.s32 1, %s20
      %p26 = scmp.ge.s32.totalorder %s25, 4
      %s27 = scalar_select %p26, 0, %s25
      %s28 = sadd.s32 1, %s19
      %s29 = scalar_select %p26, %s28, %s19
      %p30 = scmp.ge.s32.totalorder %s29, 1
      %s31 = scalar_select %p30, 0, %s29
      %s32 = ssub.s32 %s20, %s27
      %p33 = scmp.eq.s32.totalorder %s32, 0
      %s35 = sadd.s32 %s34, 1
      %s36 = scalar_select %p33, %s34, %s35
      %p39 = pneg %p33
      %p40 = scmp.eq.s32.totalorder %s12, 3
      %p41 = por %p39, %p40
      %p42 = scmp.ne.s32.totalorder %s34, %s37
      %p43 = scmp.eq.s32.totalorder %s12, 0
      %p44 = por %p42, %p43
      %p45 = scmp.ne.s32.totalorder %s34, %s37
      %p46 = scmp.eq.s32.totalorder %s17, 3
      %p47 = por %p45, %p46
      %p48 = scmp.ne.s32.totalorder %s37, %s38
      %p49 = scmp.eq.s32.totalorder %s17, 0
      %p50 = por %p48, %p49
      %p51 = scmp.ne.s32.totalorder %s37, %s38
      %p52 = scmp.eq.s32.totalorder %s18, 3
      %p53 = por %p51, %p52
      %p55 = scmp.ne.s32.totalorder %s38, %s54
      %p56 = scmp.eq.s32.totalorder %s18, 0
      %p57 = por %p55, %p56
      %s58 = ssub.s32 %s19, %s31
      %p59 = scmp.eq.s32.totalorder %s58, 0
      %s61 = sadd.s32 %s60, 1
      %s62 = scalar_select %p59, %s60, %s61
      %p65 = pneg %p59
      %p66 = scmp.eq.s32.totalorder %s12, 3
      %p67 = por %p65, %p66
      %p68 = scmp.ne.s32.totalorder %s60, %s63
      %p69 = scmp.eq.s32.totalorder %s12, 0
      %p70 = por %p68, %p69
      %p71 = scmp.ne.s32.totalorder %s60, %s63
      %p72 = scmp.eq.s32.totalorder %s17, 3
      %p73 = por %p71, %p72
      %p74 = scmp.ne.s32.totalorder %s63, %s64
      %p75 = scmp.eq.s32.totalorder %s17, 0
      %p76 = por %p74, %p75
      %p77 = scmp.ne.s32.totalorder %s63, %s64
      %p78 = scmp.eq.s32.totalorder %s18, 3
      %p79 = por %p77, %p78
      %p81 = scmp.ne.s32.totalorder %s64, %s80
      %p82 = scmp.eq.s32.totalorder %s18, 0
      %p83 = por %p81, %p82
      %s84 = ssub.s32 %s19, %s31
      %p85 = scmp.eq.s32.totalorder %s84, 0
      %s87 = sadd.s32 %s86, 1
      %s88 = scalar_select %p85, %s86, %s87
      %p91 = pneg %p85
      %p92 = scmp.eq.s32.totalorder %s12, 3
      %p93 = por %p91, %p92
      %p94 = scmp.ne.s32.totalorder %s86, %s89
      %p95 = scmp.eq.s32.totalorder %s12, 0
      %p96 = por %p94, %p95
      %p97 = scmp.ne.s32.totalorder %s86, %s89
      %p98 = scmp.eq.s32.totalorder %s17, 3
      %p99 = por %p97, %p98
      %p100 = scmp.ne.s32.totalorder %s89, %s90
      %p101 = scmp.eq.s32.totalorder %s17, 0
      %p102 = por %p100, %p101
      %p103 = scmp.ne.s32.totalorder %s89, %s90
      %p104 = scmp.eq.s32.totalorder %s18, 3
      %p105 = por %p103, %p104
      %p107 = scmp.ne.s32.totalorder %s90, %s106
      %p108 = scmp.eq.s32.totalorder %s18, 0
      %p109 = por %p107, %p108
      %s110 = ssub.s32 %s20, %s27
      %s111 = ssub.s32 %s19, %s31
      %s112 = sor.u32 %s110, %s111
      %p113 = scmp.eq.s32.totalorder %s112, 0
      %s115 = sadd.s32 %s114, 1
      %s116 = scalar_select %p113, %s114, %s115
      %p119 = pneg %p113
      %p120 = scmp.eq.s32.totalorder %s12, 3
      %p121 = por %p119, %p120
      %p122 = scmp.ne.s32.totalorder %s114, %s117
      %p123 = scmp.eq.s32.totalorder %s12, 0
      %p124 = por %p122, %p123
      %p125 = scmp.ne.s32.totalorder %s114, %s117
      %p126 = scmp.eq.s32.totalorder %s17, 3
      %p127 = por %p125, %p126
      %p128 = scmp.ne.s32.totalorder %s117, %s118
      %p129 = scmp.eq.s32.totalorder %s17, 0
      %p130 = por %p128, %p129
      %p131 = scmp.ne.s32.totalorder %s117, %s118
      %p132 = scmp.eq.s32.totalorder %s18, 3
      %p133 = por %p131, %p132
      %p135 = scmp.ne.s32.totalorder %s118, %s134
      %p136 = scmp.eq.s32.totalorder %s18, 0
      %p137 = por %p135, %p136
      %p138 = scmp.le.s32.totalorder 1, %s12
      %p139 = scmp.lt.s32.totalorder %s12, 5
      %p140 = pnand %p138, %p139
      %p141 = pneg %p140
      // Predicated region
      $region9: #{tpu_custom_call.1} parent=5 // pred_check
        _
      $region10: #{tpu_custom_call.1} parent=5 // pred_check_branch
        %143 = sbr.rel (%p140) target = $region12
      $region11: #{tpu_custom_call.1} parent=5 // pred_region
        %s144 = ssub.s32 %s12, 1
        // Predicated region
        $region13: #{tpu_custom_call.1} parent=11 // pred_check
          %p145 = pneg %p76
        $region14: #{tpu_custom_call.1} parent=11 // pred_check_branch
          %147 = sbr.rel (%p145) target = $region16
        $region15: #{tpu_custom_call.1} parent=11 // pred_region
          %p148 = scmp.lt.s32.totalorder %s21, 0
          %s149 = scalar_select %p148, %s21, 0
          %s150 = smul.addr %s149, 4
          %s151 = scalar_lea.vmem %s1, %s150
        $region16: #{tpu_custom_call.1} parent=11 // pred_fallthru
          _
        // Predicated region
        $region17: #{tpu_custom_call.1} parent=11 // pred_check
          %p152 = pneg %p102
        $region18: #{tpu_custom_call.1} parent=11 // pred_check_branch
          %154 = sbr.rel (%p152) target = $region20
        $region19: #{tpu_custom_call.1} parent=11 // pred_region
          %p155 = scmp.lt.s32.totalorder %s21, 0
          %s156 = scalar_select %p155, %s21, 0
          %s157 = scalar_lea.vmem %s2, %s156
        $region20: #{tpu_custom_call.1} parent=11 // pred_fallthru
          _
      $region12: #{tpu_custom_call.1} parent=5 // pred_fallthru
        _
      %p158 = scmp.lt.s32.totalorder %s12, 4
      // Predicated region
      $region21: #{tpu_custom_call.1} parent=5 // pred_check
        %p159 = pneg %p158
      $region22: #{tpu_custom_call.1} parent=5 // pred_check_branch
        %161 = sbr.rel (%p159) target = $region24
      $region23: #{tpu_custom_call.1} parent=5 // pred_region
        // Predicated region
        $region25: #{tpu_custom_call.1} parent=23 // pred_check
          %p162 = pneg %p44
        $region26: #{tpu_custom_call.1} parent=23 // pred_check_branch
          %164 = sbr.rel (%p162) target = $region28
        $region27: #{tpu_custom_call.1} parent=23 // pred_region
          %s165 = smul.u32 16, %s20
          %p166 = scmp.lt.s32.totalorder %s165, 63
          %s167 = scalar_select %p166, %s165, 63
          %s168 = smul.addr %s167, 4
          %s169 = scalar_lea.vmem %s0, %s168
          %s170 = smul.u32 16, %s20
        $region28: #{tpu_custom_call.1} parent=23 // pred_fallthru
          _
      $region24: #{tpu_custom_call.1} parent=5 // pred_fallthru
        _
      %p171 = scmp.le.s32.totalorder 1, %s12
      %p172 = scmp.lt.s32.totalorder %s12, 5
      %p173 = pnand %p171, %p172
      %p174 = pneg %p173
      // Predicated region
      $region29: #{tpu_custom_call.1} parent=5 // pred_check
        _
      $region30: #{tpu_custom_call.1} parent=5 // pred_check_branch
        %176 = sbr.rel (%p173) target = $region32
      $region31: #{tpu_custom_call.1} parent=5 // pred_region
        %s177 = ssub.s32 %s12, 1
        %s178 = smul.u32 16, %s22
        %p179 = scmp.lt.s32.totalorder %s178, 63
        %s180 = scalar_select %p179, %s178, 63
        %s181 = smul.addr %s180, 4
        %s182 = scalar_lea.vmem %s0, %s181
        %p183 = pneg %p50
        %p184 = pneg %p47
        %p185 = scmp.lt.s32.totalorder %s21, 0
        %s186 = scalar_select %p185, %s21, 0
        %s187 = smul.addr %s186, 4
        %s188 = scalar_lea.vmem %s1, %s187
        %p189 = pneg %p76
        %p190 = pneg %p73
        %p191 = scmp.lt.s32.totalorder %s21, 0
        %s192 = scalar_select %p191, %s21, 0
        %s193 = scalar_lea.vmem %s2, %s192
        %p194 = pneg %p102
        %p195 = pneg %p99
        %p196 = pneg %p130
        %p197 = pneg %p127
        %s198 = sand.u32 %s117, 1
        %s199 = scalar_lea.sflag [#allocation3], %s198
        %s200 = sand.u32 %s117, 1
        %s201 = smul.addr %s200, 128
        %s202 = scalar_lea.vmem [#allocation2], %s201
        %s203 = smul.u32 16, %s22
        %p204 = scmp.lt.s32.totalorder %s203, 63
        %s205 = scalar_select %p204, %s203, 63
        %s206 = smul.addr %s205, 4
        %s207 = scalar_lea.vmem %s0, %s206
        %s208 = smul.u32 16, %s22
        %p209 = scmp.lt.s32.totalorder %s21, 0
        %s210 = scalar_select %p209, %s21, 0
        %s211 = smul.addr %s210, 4
        %s212 = scalar_lea.vmem %s1, %s211
        %p213 = scmp.lt.s32.totalorder %s21, 0
        %s214 = scalar_select %p213, %s21, 0
        %s215 = scalar_lea.vmem %s2, %s214
        %s216 = smul.u32 16, %s22
        %v218 = vld [vmem:[%s207] sm:$0xf]
        %v219 = vld [vmem:[%s207 + $0x4] sm:$0xf]
        %v220 = vld [vmem:[%s207 + $0x8] sm:$0xf]
        %v221 = vld [vmem:[%s207 + $0xc] sm:$0xf]
        %v222 = vld [vmem:[%s207 + $0x10] sm:$0xf]
        %v223 = vld [vmem:[%s207 + $0x14] sm:$0xf]
        %v224 = vld [vmem:[%s207 + $0x18] sm:$0xf]
        %v225 = vld [vmem:[%s207 + $0x1c] sm:$0xf]
        %v226 = vld [vmem:[%s207 + $0x20] sm:$0xf]
        %v227 = vld [vmem:[%s207 + $0x24] sm:$0xf]
        %v228 = vld [vmem:[%s207 + $0x28] sm:$0xf]
        %v229 = vld [vmem:[%s207 + $0x2c] sm:$0xf]
        %v230 = vld [vmem:[%s207 + $0x30] sm:$0xf]
        %v231 = vld [vmem:[%s207 + $0x34] sm:$0xf]
        %v232 = vld [vmem:[%s207 + $0x38] sm:$0xf]
        %v233 = vld [vmem:[%s207 + $0x3c] sm:$0xf]
        %v234 = vld [vmem:[%s212] sm:$0xf]
        %v235 = vld [vmem:[%s212 + $0x4] sm:$0xf]
        %v236 = vld [vmem:[%s212 + $0x8] sm:$0xf]
        %v237 = vld [vmem:[%s212 + $0xc] sm:$0xf]
        %v238 = vld [vmem:[%s212 + $0x10] sm:$0xf]
        %v239 = vld [vmem:[%s212 + $0x14] sm:$0xf]
        %v240 = vld [vmem:[%s215] sm:$0x1]
        %v242 = vlaneseq
        %v243 = vshrl.u32 %v242, 7
        %v244 = vsub.s32 0, %v243
        %v245 = vrot.slane %v240, %v244
        %v263 = vunpack.c.l.b16 %v218
        %v264 = vunpack.c.l.b16 %v219
        %v265 = vunpack.c.l.b16 %v220
        %v266 = vunpack.c.l.b16 %v221
        %v267 = vunpack.c.l.b16 %v222
        %v268 = vunpack.c.l.b16 %v223
        %v269 = vunpack.c.l.b16 %v224
        %v270 = vunpack.c.l.b16 %v225
        %v271 = vunpack.c.l.b16 %v226
        %v272 = vunpack.c.l.b16 %v227
        %v273 = vunpack.c.l.b16 %v228
        %v274 = vunpack.c.l.b16 %v229
        %v275 = vunpack.c.l.b16 %v230
        %v276 = vunpack.c.l.b16 %v231
        %v277 = vunpack.c.l.b16 %v232
        %v278 = vunpack.c.l.b16 %v233
        %v279 = vpack.c.b16 %v264, %v263
        %v280 = vpack.c.b16 %v266, %v265
        %v281 = vpack.c.b16 %v268, %v267
        %v282 = vpack.c.b16 %v270, %v269
        %v283 = vpack.c.b16 %v272, %v271
        %v284 = vpack.c.b16 %v274, %v273
        %v285 = vpack.c.b16 %v276, %v275
        %v286 = vpack.c.b16 %v278, %v277
        %v293 = vunpack.c.l.b16 %v234
        %v294 = vunpack.c.l.b16 %v235
        %v295 = vunpack.c.l.b16 %v236
        %v296 = vunpack.c.l.b16 %v237
        %v297 = vunpack.c.l.b16 %v238
        %v298 = vunpack.c.l.b16 %v239
        %v299 = vpack.c.b16 %v294, %v293
        %v300 = vpack.c.b16 %v296, %v295
        %v301 = vpack.c.b16 %v298, %v297
        %vm305 = vcmask 392192
        %v307 = vsel %vm305, %v279, 0
        %v310 = vsel %vm305, %v280, 0
        %v313 = vsel %vm305, %v281, 0
        %v316 = vsel %vm305, %v282, 0
        %v319 = vsel %vm305, %v283, 0
        %v322 = vsel %vm305, %v284, 0
        %v325 = vsel %vm305, %v285, 0
        %v328 = vsel %vm305, %v286, 0
        %330 = vmatprep.subr.bf16.mxu0 0
        %331 = vmatpush1.bf16.msra.mxu0 0
        %332 = vmatprep.subr.bf16.mxu0 0
        %333 = vmatpush1.bf16.msra.mxu0 0
        %334 = vmatprep.subr.bf16.mxu0 0
        %335 = vmatpush1.bf16.msra.mxu0 0
        %336 = vmatprep.subr.bf16.mxu0 0
        %337 = vmatpush1.bf16.msra.mxu0 0
        %338 = vmatprep.subr.bf16.mxu0 0
        %339 = vmatpush1.bf16.msra.mxu0 0
        %340 = vmatprep.subr.bf16.mxu0 0
        %341 = vmatpush1.bf16.msra.mxu0 %v301
        %342 = vmatprep.subr.bf16.mxu0 0
        %343 = vmatpush1.bf16.msra.mxu0 %v300
        %344 = vmatprep.subr.bf16.mxu0 0
        %345 = vmatpush1.bf16.msra.mxu0 %v299
        %346 = vmatprep.subr.bf16.mxu0 0
        %347 = vmatpush2.bf16.msra.mxu0 0
        %348 = vmatprep.subr.bf16.mxu0 0
        %349 = vmatpush2.bf16.msra.mxu0 0
        %350 = vmatprep.subr.bf16.mxu0 0
        %351 = vmatpush2.bf16.msra.mxu0 0
        %352 = vmatprep.subr.bf16.mxu0 0
        %353 = vmatpush2.bf16.msra.mxu0 0
        %354 = vmatprep.subr.bf16.mxu0 0
        %355 = vmatpush2.bf16.msra.mxu0 0
        %356 = vmatprep.subr.bf16.mxu0 0
        %357 = vmatpush2.bf16.msra.mxu0 0
        %358 = vmatprep.subr.bf16.mxu0 0
        %359 = vmatpush2.bf16.msra.mxu0 0
        %360 = vmatprep.subr.bf16.mxu0 0
        %361 = vmatpush2.bf16.msra.mxu0 0
        %362 = vmatprep.mubr.bf16.mxu0 0
        %363 = vmatmul.mubr.bf16.gmra.mxu0 %v307
        %v364 = vpop.f32.mrf.mxu0
        %v365 = vadd.f32 %v245, %v364
        %v366 = vpop.f32.mrf.mxu0
        %v367 = vpop.f32.mrf.mxu0
        %v368 = vadd.f32 %v245, %v367
        %v369 = vpop.f32.mrf.mxu0
        %370 = vmatprep.mubr.bf16.mxu0 0
        %371 = vmatmul.mubr.bf16.gmra.mxu0 %v310
        %v372 = vpop.f32.mrf.mxu0
        %v373 = vadd.f32 %v245, %v372
        %v374 = vpop.f32.mrf.mxu0
        %v375 = vpop.f32.mrf.mxu0
        %v376 = vadd.f32 %v245, %v375
        %v377 = vpop.f32.mrf.mxu0
        %378 = vmatprep.mubr.bf16.mxu0 0
        %379 = vmatmul.mubr.bf16.gmra.mxu0 %v313
        %v380 = vpop.f32.mrf.mxu0
        %v381 = vadd.f32 %v245, %v380
        %v382 = vpop.f32.mrf.mxu0
        %v383 = vpop.f32.mrf.mxu0
        %v384 = vadd.f32 %v245, %v383
        %v385 = vpop.f32.mrf.mxu0
        %386 = vmatprep.mubr.bf16.mxu0 0
        %387 = vmatmul.mubr.bf16.gmra.mxu0 %v316
        %v388 = vpop.f32.mrf.mxu0
        %v389 = vadd.f32 %v245, %v388
        %v390 = vpop.f32.mrf.mxu0
        %v391 = vpop.f32.mrf.mxu0
        %v392 = vadd.f32 %v245, %v391
        %v393 = vpop.f32.mrf.mxu0
        %394 = vmatprep.mubr.bf16.mxu0 0
        %395 = vmatmul.mubr.bf16.gmra.mxu0 %v319
        %v396 = vpop.f32.mrf.mxu0
        %v397 = vadd.f32 %v245, %v396
        %v398 = vpop.f32.mrf.mxu0
        %v399 = vpop.f32.mrf.mxu0
        %v400 = vadd.f32 %v245, %v399
        %v401 = vpop.f32.mrf.mxu0
        %402 = vmatprep.mubr.bf16.mxu0 0
        %403 = vmatmul.mubr.bf16.gmra.mxu0 %v322
        %v404 = vpop.f32.mrf.mxu0
        %v405 = vadd.f32 %v245, %v404
        %v406 = vpop.f32.mrf.mxu0
        %v407 = vpop.f32.mrf.mxu0
        %v408 = vadd.f32 %v245, %v407
        %v409 = vpop.f32.mrf.mxu0
        %410 = vmatprep.mubr.bf16.mxu0 0
        %411 = vmatmul.mubr.bf16.gmra.mxu0 %v325
        %v412 = vpop.f32.mrf.mxu0
        %v413 = vadd.f32 %v245, %v412
        %v414 = vpop.f32.mrf.mxu0
        %v415 = vpop.f32.mrf.mxu0
        %v416 = vadd.f32 %v245, %v415
        %v417 = vpop.f32.mrf.mxu0
        %418 = vmatprep.mubr.bf16.mxu0 0
        %419 = vmatmul.mubr.bf16.gmra.mxu0 %v328
        %v420 = vpop.f32.mrf.mxu0
        %v421 = vadd.f32 %v245, %v420
        %v422 = vpop.f32.mrf.mxu0
        %v423 = vpop.f32.mrf.mxu0
        %v424 = vadd.f32 %v245, %v423
        %v425 = vpop.f32.mrf.mxu0
        %426 = vdwg.mxu0
        %v427 = vmax.f32 %v365, 0.0
        %v428 = vmax.f32 %v368, 0.0
        %v429 = vmax.f32 %v373, 0.0
        %v430 = vmax.f32 %v376, 0.0
        %v431 = vmax.f32 %v381, 0.0
        %v432 = vmax.f32 %v384, 0.0
        %v433 = vmax.f32 %v389, 0.0
        %v434 = vmax.f32 %v392, 0.0
        %v435 = vmax.f32 %v397, 0.0
        %v436 = vmax.f32 %v400, 0.0
        %v437 = vmax.f32 %v405, 0.0
        %v438 = vmax.f32 %v408, 0.0
        %v439 = vmax.f32 %v413, 0.0
        %v440 = vmax.f32 %v416, 0.0
        %v441 = vmax.f32 %v421, 0.0
        %v442 = vmax.f32 %v424, 0.0
        %443 = vst [vmem:[%s202] sm:$0xff] %v427
        %444 = vst [vmem:[%s202 + $0x8] sm:$0xff] %v428
        %445 = vst [vmem:[%s202 + $0x10] sm:$0xff] %v429
        %446 = vst [vmem:[%s202 + $0x18] sm:$0xff] %v430
        %447 = vst [vmem:[%s202 + $0x20] sm:$0xff] %v431
        %448 = vst [vmem:[%s202 + $0x28] sm:$0xff] %v432
        %449 = vst [vmem:[%s202 + $0x30] sm:$0xff] %v433
        %450 = vst [vmem:[%s202 + $0x38] sm:$0xff] %v434
        %451 = vst [vmem:[%s202 + $0x40] sm:$0xff] %v435
        %452 = vst [vmem:[%s202 + $0x48] sm:$0xff] %v436
        %453 = vst [vmem:[%s202 + $0x50] sm:$0xff] %v437
        %454 = vst [vmem:[%s202 + $0x58] sm:$0xff] %v438
        %455 = vst [vmem:[%s202 + $0x60] sm:$0xff] %v439
        %456 = vst [vmem:[%s202 + $0x68] sm:$0xff] %v440
        %457 = vst [vmem:[%s202 + $0x70] sm:$0xff] %v441
        %458 = vst [vmem:[%s202 + $0x78] sm:$0xff] %v442
        %s459 = sand.u32 %s117, 1
        %s460 = scalar_lea.sflag [#allocation3], %s459
        %s461 = sand.u32 %s117, 1
        %s462 = smul.addr %s461, 128
        %s463 = scalar_lea.vmem [#allocation2], %s462
        // Predicated region
        $region33: #{tpu_custom_call.1} parent=31 // pred_check
          %p464 = pneg %p127
        $region34: #{tpu_custom_call.1} parent=31 // pred_check_branch
          %466 = sbr.rel (%p464) target = $region36
        $region35: #{tpu_custom_call.1} parent=31 // pred_region
          %s467 = smul.u32 16, %s22
          %s469 = ssub.s32 2048, 2048
          %470 = vsyncadd %s460, %s469
          %s471 = sadd.s32 %s21, %s467
          %s472 = smul.addr %s471, 128
          %s473 = scalar_lea.hbm %s3, %s472
          %s474 = sshll.u32 %s463, 4
          %s475 = int_to_ptr.vmem [resolvable:$true] %s474
          %480 = dma.vmem_to_hbm [thread:$0]  %s475, 2048, %s473, %s460, 128, 128, 8
        $region36: #{tpu_custom_call.1} parent=31 // pred_fallthru
          _
      $region32: #{tpu_custom_call.1} parent=5 // pred_fallthru
        _
      %p481 = scmp.le.s32.totalorder 2, %s12
      // Predicated region
      $region37: #{tpu_custom_call.1} parent=5 // pred_check
        %p482 = pneg %p481
      $region38: #{tpu_custom_call.1} parent=5 // pred_check_branch
        %484 = sbr.rel (%p482) target = $region40
      $region39: #{tpu_custom_call.1} parent=5 // pred_region
        %s485 = ssub.s32 %s12, 2
        // Predicated region
        $region41: #{tpu_custom_call.1} parent=39 // pred_check
          %p486 = pneg %p133
        $region42: #{tpu_custom_call.1} parent=39 // pred_check_branch
          %488 = sbr.rel (%p486) target = $region44
        $region43: #{tpu_custom_call.1} parent=39 // pred_region
          %s489 = sand.u32 %s118, 1
          %s490 = scalar_lea.sflag [#allocation3], %s489
          %s491 = sand.u32 %s118, 1
          %s492 = smul.addr %s491, 128
          %s493 = scalar_lea.vmem [#allocation2], %s492
          %494 = dma.done %s490, 2048
        $region44: #{tpu_custom_call.1} parent=39 // pred_fallthru
          _
      $region40: #{tpu_custom_call.1} parent=5 // pred_fallthru
        _
    $region6: #{tpu_custom_call.1} parent=1 // loop_footer
      %s16 = sadd.s32 1, %s12
    $region7: #{tpu_custom_call.1} parent=1 // loop_footer_branch
      %11 = sbr.rel target = $region3
    $region8: #{tpu_custom_call.1} parent=1 // loop_exit
      _
    %495 = vsyncpa [#allocation3], 1
    %s496 = scalar_lea.sflag [#allocation3], 1
    %497 = vsyncpa %s496, 1

</llo_original>
